<compile_context>
chip_gen: v7x
topology: tpu7x:2x2x1
jax: 0.10.0
libtpu: 0.0.40
codegen_flags: <defaults>
</compile_context>

<pallas_src>
import functools

import jax
import jax.numpy as jnp
from jax.experimental import pallas as pl
from jax.experimental.pallas import tpu as pltpu


def _round_up(x, m):
    return pl.cdiv(x, m) * m


# ----------------------------- Pallas kernel ------------------------------

def _conv_relu_stats_kernel(p_ref, w_ref, b_ref, o_ref, stats_ref, *, tm, m_valid):
    # p_ref : (Kp, tm)     bf16   im2col patches, M (lane-dense) tile
    # w_ref : (Coutp, Kp)  bf16   resident across grid steps (constant index map)
    # b_ref : (Coutp, 1)   f32
    # o_ref : (Coutp, tm)  f32    conv + bias + ReLU output tile
    # stats_ref : (1, 2*Coutp, 128) f32  rows [0:Coutp) = sum, [Coutp:2*Coutp) = sum(y^2)
    i = pl.program_id(0)
    last = pl.num_programs(0) - 1

    y = jnp.dot(w_ref[...], p_ref[...], preferred_element_type=jnp.float32)
    y = jnp.maximum(y + b_ref[...], 0.0)
    o_ref[...] = y

    coutp = y.shape[0]

    def write_stats(v):
        s = jnp.sum(v, axis=1, keepdims=True)          # (Coutp, 1)  cross-lane reduce (XLU)
        ss = jnp.sum(v * v, axis=1, keepdims=True)     # (Coutp, 1)
        st = jnp.concatenate([s, ss], axis=0)          # (2*Coutp, 1)
        stats_ref[...] = jnp.broadcast_to(st, (2 * coutp, 128))[None]

    # Only the last tile can contain M-padding; mask it there, plain sums elsewhere.
    @pl.when(i != last)
    def _():
        write_stats(y)

    @pl.when(i == last)
    def _():
        col = jax.lax.broadcasted_iota(jnp.int32, (1, tm), 1) + i * tm
        write_stats(jnp.where(col < m_valid, y, 0.0))


# ------------------------------ wrapper (glue) ------------------------------

def _choose_tm(M, Kp, Coutp, tm):
    if tm is not None:
        return tm
    # Per-step VMEM (double-buffered): patches 2*Kp*tm*2B + out 2*Coutp*tm*4B (+ small).
    budget = 40 * 1024 * 1024
    per_lane = 4 * Kp + 8 * Coutp
    tm_vmem = max(128, (budget // per_lane) // 128 * 128)
    tm_target = min(2048, tm_vmem)
    # Keep at least 2 grid steps when possible so both v7x TensorCores get work.
    half = max(128, _round_up(pl.cdiv(M, 2), 128))
    return min(tm_target, half)


def conv_block_forward(x, w, b, gamma, beta, *, stride, eps=1e-5, tm=None,
                       matmul_dtype=jnp.bfloat16):
    """x: (N, Cin, H, W) NCHW; w: (Cout, Cin, k, k); b/gamma/beta: (Cout,)."""
    N, Cin, H, W = x.shape
    Cout, _, k, _ = w.shape
    pad = (k - 1) // 2
    Ho = (H + 2 * pad - k) // stride + 1
    Wo = (W + 2 * pad - k) // stride + 1
    M = N * Ho * Wo
    K = k * k * Cin

    # --- im2col in bf16, transposed to (K, M) so M is the lane-dense last dim ---
    x_nhwc = jnp.transpose(x, (0, 2, 3, 1)).astype(matmul_dtype)
    xp = jnp.pad(x_nhwc, ((0, 0), (pad, pad), (pad, pad), (0, 0)))
    cols = []
    for kh in range(k):
        for kw in range(k):
            cols.append(xp[:, kh:kh + stride * Ho:stride,
                           kw:kw + stride * Wo:stride, :])        # (N, Ho, Wo, Cin)
    # (k*k, N, Ho, Wo, Cin) -> (k*k, Cin, N, Ho, Wo) -> (K, M); K order = (kh, kw, cin)
    patches_t = jnp.stack(cols, axis=0).transpose(0, 4, 1, 2, 3).reshape(K, M)

    # Weight in matching K order: (Cout, kh, kw, cin) -> (Cout, K)
    w_t = jnp.transpose(w, (0, 2, 3, 1)).reshape(Cout, K).astype(matmul_dtype)

    # Padding: Cout/K to bf16 sublane quantum (16), M to a multiple of tm (tm % 128 == 0).
    Coutp = _round_up(Cout, 16)
    Kp = _round_up(K, 16)
    tm = _choose_tm(M, Kp, Coutp, tm)
    Mp = _round_up(M, tm)
    n_tiles = Mp // tm

    patches_t = jnp.pad(patches_t, ((0, Kp - K), (0, Mp - M)))
    w_t = jnp.pad(w_t, ((0, Coutp - Cout), (0, Kp - K)))
    b_col = jnp.pad(b.astype(jnp.float32), (0, Coutp - Cout)).reshape(Coutp, 1)

    # --- Pallas: conv-as-matmul + bias + ReLU + fused BN statistics, tiled over M ---
    conv_out, stats = pl.pallas_call(
        functools.partial(_conv_relu_stats_kernel, tm=tm, m_valid=M),
        out_shape=(
            jax.ShapeDtypeStruct((Coutp, Mp), jnp.float32),
            jax.ShapeDtypeStruct((n_tiles, 2 * Coutp, 128), jnp.float32),
        ),
        grid_spec=pltpu.PrefetchScalarGridSpec(
            num_scalar_prefetch=0,
            grid=(n_tiles,),
            in_specs=[
                pl.BlockSpec((Kp, tm), lambda i: (0, i)),
                pl.BlockSpec((Coutp, Kp), lambda i: (0, 0)),
                pl.BlockSpec((Coutp, 1), lambda i: (0, 0)),
            ],
            out_specs=[
                pl.BlockSpec((Coutp, tm), lambda i: (0, i)),
                pl.BlockSpec((1, 2 * Coutp, 128), lambda i: (i, 0, 0)),
            ],
        ),
        compiler_params=pltpu.CompilerParams(
            dimension_semantics=("parallel",),
            vmem_limit_bytes=48 * 1024 * 1024),   # fits v7x 64 MiB with headroom
    )(patches_t, w_t, b_col)

    # --- BN fold + apply in plain JAX on the compact (Cout, M) slice (fuses with the
    # final transpose; no extra pallas pass over a padded slab). ---
    y = conv_out[:Cout, :M]                              # (Cout, M) f32
    tot = jnp.sum(stats, axis=0)                         # (2*Coutp, 128), lanes identical
    s_sum = tot[0:Cout, 0]
    s_sq = tot[Coutp:Coutp + Cout, 0]
    mean = s_sum / M
    var = s_sq / M - mean * mean                         # biased variance (training BN)
    inv = jax.lax.rsqrt(var + eps)
    scale = gamma.astype(jnp.float32) * inv
    shift = beta.astype(jnp.float32) - mean * scale
    out = y * scale[:, None] + shift[:, None]            # (Cout, M)
    out = out.reshape(Cout, N, Ho, Wo).transpose(1, 0, 2, 3)
    return out


# ----------------------------------- main -----------------------------------

if __name__ == "__main__":
    # ConvBlock(in_channel=4, out_channel=8, kernel_size=3, stride=1)
    N, Cin, H, W = 2, 4, 16, 16
    Cout, ksz, stride = 8, 3, 1

    key = jax.random.PRNGKey(0)
    k1, k2, k3, k4, k5 = jax.random.split(key, 5)
    x = jax.random.normal(k1, (N, Cin, H, W), dtype=jnp.float32)
    w = jax.random.normal(k2, (Cout, Cin, ksz, ksz), dtype=jnp.float32) * 0.1
    b = jax.random.normal(k3, (Cout,), dtype=jnp.float32) * 0.1
    gamma = 1.0 + 0.1 * jax.random.normal(k4, (Cout,), dtype=jnp.float32)
    beta = 0.1 * jax.random.normal(k5, (Cout,), dtype=jnp.float32)

    out = conv_block_forward(x, w, b, gamma, beta, stride=stride)
    out = jax.block_until_ready(out)

    # Pure-JAX reference (same semantics as PyTorch ConvBlock.forward in train mode).
    # The kernel feeds the MXU bf16 operands (f32 accumulation), so the reference uses
    # the same bf16-rounded operands to make the comparison apples-to-apples.
    pad = (ksz - 1) // 2
    x_q = x.astype(jnp.bfloat16).astype(jnp.float32)
    w_q = w.astype(jnp.bfloat16).astype(jnp.float32)
    ref = jax.lax.conv_general_dilated(
        x_q, w_q, (stride, stride), [(pad, pad), (pad, pad)],
        dimension_numbers=("NCHW", "OIHW", "NCHW"))
    ref = jnp.maximum(ref + b[None, :, None, None], 0.0)
    mean = ref.mean(axis=(0, 2, 3), keepdims=True)
    var = ((ref - mean) ** 2).mean(axis=(0, 2, 3), keepdims=True)  # biased
    ref = (ref - mean) / jnp.sqrt(var + 1e-5)
    ref = ref * gamma[None, :, None, None] + beta[None, :, None, None]

    assert out.shape == (N, Cout, H, W)
    assert jnp.max(jnp.abs(out - ref)) < 1e-3, "mismatch vs reference"
    print("KERNEL_OK")
</pallas_src>

<mosaic_0001>
module attributes {stable_mosaic.version = 11 : i64} {
  func.func @_conv_relu_stats_kernel(%arg0: i32, %arg1: memref<48x256xbf16, #tpu.memory_space<vmem>>, %arg2: memref<16x48xbf16, #tpu.memory_space<vmem>>, %arg3: memref<16x1xf32, #tpu.memory_space<vmem>>, %arg4: memref<16x256xf32, #tpu.memory_space<vmem>>, %arg5: memref<1x32x128xf32, #tpu.memory_space<vmem>>) attributes {dimension_semantics = [#tpu.dimension_semantics<parallel>], iteration_bounds = array<i64: 2>, scalar_prefetch = 0 : i64, scratch_operands = 0 : i64, tpu.core_type = #tpu.core_type<tc>, window_params = [{transform_indices = @transform_0, window_bounds = array<i64: 48, 256>}, {pipeline_mode = #tpu.pipeline_mode<synchronous>, transform_indices = @transform_1, window_bounds = array<i64: 16, 48>}, {pipeline_mode = #tpu.pipeline_mode<synchronous>, transform_indices = @transform_2, window_bounds = array<i64: 16, 1>}, {transform_indices = @transform_3, window_bounds = array<i64: 16, 256>}, {transform_indices = @transform_4, window_bounds = array<i64: 1, 32, 128>}]} {
    %c0 = arith.constant 0 : index
    %c0_0 = arith.constant 0 : index
    %0 = vector.load %arg2[%c0, %c0_0] : memref<16x48xbf16, #tpu.memory_space<vmem>>, vector<16x48xbf16>
    %c0_1 = arith.constant 0 : index
    %c0_2 = arith.constant 0 : index
    %1 = vector.load %arg1[%c0_1, %c0_2] : memref<48x256xbf16, #tpu.memory_space<vmem>>, vector<48x256xbf16>
    %cst = arith.constant dense<0.000000e+00> : vector<16x256xf32>
    %2 = tpu.matmul %0, %1, %cst {dimension_numbers = #tpu.dot_dimension_numbers<[1], [0], [0], [1], [0, 0, 1, 1], [], []>} : vector<16x48xbf16>, vector<48x256xbf16>, vector<16x256xf32> -> vector<16x256xf32>
    %c0_3 = arith.constant 0 : index
    %c0_4 = arith.constant 0 : index
    %3 = vector.load %arg3[%c0_3, %c0_4] : memref<16x1xf32, #tpu.memory_space<vmem>>, vector<16x1xf32>
    %4 = vector.broadcast %3 : vector<16x1xf32> to vector<16x256xf32>
    %5 = arith.addf %2, %4 : vector<16x256xf32>
    %cst_5 = arith.constant 0.000000e+00 : f32
    %6 = vector.broadcast %cst_5 : f32 to vector<16x256xf32>
    %7 = arith.maximumf %5, %6 : vector<16x256xf32>
    %c0_6 = arith.constant 0 : index
    %c0_7 = arith.constant 0 : index
    %8 = vector.load %arg4[%c0_6, %c0_7] : memref<16x256xf32, #tpu.memory_space<vmem>>, vector<16x256xf32>
    tpu.vector_store %arg4[%c0_6, %c0_7], %7 {strides = array<i32>} : memref<16x256xf32, #tpu.memory_space<vmem>>, vector<16x256xf32>,
    %c1_i32 = arith.constant 1 : i32
    %9 = arith.cmpi ne, %arg0, %c1_i32 : i32
    %10 = arith.extui %9 : i1 to i32
    %c0_i32 = arith.constant 0 : i32
    %11 = arith.cmpi ne, %10, %c0_i32 : i32
    scf.if %11 {
      %cst_10 = arith.constant dense<0.000000e+00> : vector<16xf32>
      %15 = vector.multi_reduction <add>, %7, %cst_10 [1] : vector<16x256xf32> to vector<16xf32>
      %16 = vector.shape_cast %15 : vector<16xf32> to vector<16x1xf32>
      %17 = arith.mulf %7, %7 : vector<16x256xf32>
      %cst_11 = arith.constant dense<0.000000e+00> : vector<16xf32>
      %18 = vector.multi_reduction <add>, %17, %cst_11 [1] : vector<16x256xf32> to vector<16xf32>
      %19 = vector.shape_cast %18 : vector<16xf32> to vector<16x1xf32>
      %20 = tpu.concatenate %16, %19 in 0 : vector<16x1xf32>, vector<16x1xf32> -> vector<32x1xf32>
      %21 = vector.shape_cast %20 : vector<32x1xf32> to vector<32x1xf32>
      %22 = vector.broadcast %21 : vector<32x1xf32> to vector<32x128xf32>
      %23 = vector.shape_cast %22 : vector<32x128xf32> to vector<1x32x128xf32>
      %c0_12 = arith.constant 0 : index
      %c0_13 = arith.constant 0 : index
      %c0_14 = arith.constant 0 : index
      %24 = vector.load %arg5[%c0_12, %c0_13, %c0_14] : memref<1x32x128xf32, #tpu.memory_space<vmem>>, vector<1x32x128xf32>
      tpu.vector_store %arg5[%c0_12, %c0_13, %c0_14], %23 {strides = array<i32>} : memref<1x32x128xf32, #tpu.memory_space<vmem>>, vector<1x32x128xf32>,
    } else {
    }
    %c1_i32_8 = arith.constant 1 : i32
    %12 = arith.cmpi eq, %arg0, %c1_i32_8 : i32
    %13 = arith.extui %12 : i1 to i32
    %c0_i32_9 = arith.constant 0 : i32
    %14 = arith.cmpi ne, %13, %c0_i32_9 : i32
    scf.if %14 {
      %15 = tpu.iota {dimensions = array<i32: 1>} : vector<1x256xi32>
      %c256_i32 = arith.constant 256 : i32
      %16 = arith.muli %arg0, %c256_i32 : i32
      %17 = vector.broadcast %16 : i32 to vector<1x256xi32>
      %18 = arith.addi %15, %17 : vector<1x256xi32>
      %c512_i32 = arith.constant 512 : i32
      %19 = vector.broadcast %c512_i32 : i32 to vector<1x256xi32>
      %20 = arith.cmpi slt, %18, %19 : vector<1x256xi32>
      %cst_10 = arith.constant 0.000000e+00 : f32
      %21 = vector.shape_cast %20 : vector<1x256xi1> to vector<1x256xi1>
      %22 = vector.broadcast %21 : vector<1x256xi1> to vector<16x256xi1>
      %23 = vector.broadcast %cst_10 : f32 to vector<16x256xf32>
      %24 = arith.select %22, %7, %23 : vector<16x256xi1>, vector<16x256xf32>
      %cst_11 = arith.constant dense<0.000000e+00> : vector<16xf32>
      %25 = vector.multi_reduction <add>, %24, %cst_11 [1] : vector<16x256xf32> to vector<16xf32>
      %26 = vector.shape_cast %25 : vector<16xf32> to vector<16x1xf32>
      %27 = arith.mulf %24, %24 : vector<16x256xf32>
      %cst_12 = arith.constant dense<0.000000e+00> : vector<16xf32>
      %28 = vector.multi_reduction <add>, %27, %cst_12 [1] : vector<16x256xf32> to vector<16xf32>
      %29 = vector.shape_cast %28 : vector<16xf32> to vector<16x1xf32>
      %30 = tpu.concatenate %26, %29 in 0 : vector<16x1xf32>, vector<16x1xf32> -> vector<32x1xf32>
      %31 = vector.shape_cast %30 : vector<32x1xf32> to vector<32x1xf32>
      %32 = vector.broadcast %31 : vector<32x1xf32> to vector<32x128xf32>
      %33 = vector.shape_cast %32 : vector<32x128xf32> to vector<1x32x128xf32>
      %c0_13 = arith.constant 0 : index
      %c0_14 = arith.constant 0 : index
      %c0_15 = arith.constant 0 : index
      %34 = vector.load %arg5[%c0_13, %c0_14, %c0_15] : memref<1x32x128xf32, #tpu.memory_space<vmem>>, vector<1x32x128xf32>
      tpu.vector_store %arg5[%c0_13, %c0_14, %c0_15], %33 {strides = array<i32>} : memref<1x32x128xf32, #tpu.memory_space<vmem>>, vector<1x32x128xf32>,
    } else {
    }
    return
  }
  func.func @transform_0(%arg0: i32) -> (i32, i32) {
    %c0_i32 = arith.constant 0 : i32
    %c0_i32_0 = arith.constant 0 : i32
    return %c0_i32, %arg0 : i32, i32
  }
  func.func @transform_1(%arg0: i32) -> (i32, i32) {
    %c0_i32 = arith.constant 0 : i32
    %c0_i32_0 = arith.constant 0 : i32
    %c0_i32_1 = arith.constant 0 : i32
    return %c0_i32, %c0_i32_0 : i32, i32
  }
  func.func @transform_2(%arg0: i32) -> (i32, i32) {
    %c0_i32 = arith.constant 0 : i32
    %c0_i32_0 = arith.constant 0 : i32
    %c0_i32_1 = arith.constant 0 : i32
    return %c0_i32, %c0_i32_0 : i32, i32
  }
  func.func @transform_3(%arg0: i32) -> (i32, i32) {
    %c0_i32 = arith.constant 0 : i32
    %c0_i32_0 = arith.constant 0 : i32
    return %c0_i32, %arg0 : i32, i32
  }
  func.func @transform_4(%arg0: i32) -> (i32, i32, i32) {
    %c0_i32 = arith.constant 0 : i32
    %c0_i32_0 = arith.constant 0 : i32
    %c0_i32_1 = arith.constant 0 : i32
    return %arg0, %c0_i32, %c0_i32_0 : i32, i32, i32
  }
}

</mosaic_0001>

<llo_original>
// kernel: tpu_custom_call.1
$region0: #{tpu_custom_call.1}
  #allocation0 [shape = 'u32[]', space=smem, size = 0x4, offset = 0x4, fixed_abs, tag = 'smem constant byte address 0x4 - core index']
  #allocation1 [shape = 'u32[144,128]{1,0:T(1,128)}', space=vmem, size = 0x12000, scoped, tag = 'internal scratch']
  %s0 = inlined_call_operand.hbm [shape: bf16[48,512], index: 0, kind: input, shape index: {}]
  %s1 = inlined_call_operand.vmem [shape: bf16[16,48], index: 1, kind: input, shape index: {}]
  %s2 = inlined_call_operand.vmem [shape: f32[16,1], index: 2, kind: input, shape index: {}]
  %s3 = inlined_call_operand.hbm [shape: f32[16,512], index: 3, kind: output, shape index: {0}]
  %s4 = inlined_call_operand.hbm [shape: f32[2,32,128], index: 4, kind: output, shape index: {1}]
  %5 = xla_tuple %s3, %s4
  %s6 = sld [smem:[#allocation0]]
  $region65: #{tpu_custom_call.1} parent=0
    _
  %s8 = ssub.s32 1, %s6
  %s9 = scalar_select 0, %s8, %s6
  $region1: #{tpu_custom_call.1} parent=0
    #allocation2 [shape = 'u8[49152]{0}', space=vmem, size = 0xc000, scoped, tag = 'input window, operand 0']
    #allocation3 [shape = 's32[2]{0}', space=sflag, size = 0x8, scoped, tag = 'scoped memory for tpu_custom_call.1']
    #allocation4 [shape = 's32[2]{0}', space=sflag, size = 0x8, scoped, tag = 'scoped memory for tpu_custom_call.1']
    #allocation5 [shape = 'u8[32768]{0}', space=vmem, size = 0x8000, scoped, tag = 'output window, operand 0']
    #allocation6 [shape = 'u8[32768]{0}', space=vmem, size = 0x8000, scoped, tag = 'output window, operand 1']
    #allocation7 [shape = 's32[2]{0}', space=sflag, size = 0x8, scoped, tag = 'scoped memory for tpu_custom_call.1']
    %10 = vsyncpa [#allocation3], 0
    %s11 = scalar_lea.sflag [#allocation3], 1
    %12 = vsyncpa %s11, 0
    %13 = vsyncpa [#allocation4], 0
    %s14 = scalar_lea.sflag [#allocation4], 1
    %15 = vsyncpa %s14, 0
    %16 = vsyncpa [#allocation7], 0
    %s17 = scalar_lea.sflag [#allocation7], 1
    %18 = vsyncpa %s17, 0
    loop: start=0, step=1, limit=4
    $region2: #{tpu_custom_call.1} parent=1 // loop_pre_header
      _
    $region3: #{tpu_custom_call.1} parent=1 // loop_header
      %s20 = sphi 0, %s24
      %p21 = scmp.ge.s32.totalorder %s20, 4
      %s30 = sphi 0, %s32
      %s33 = sphi 0, %s30
      %s34 = sphi 0, %s33
      %s50 = sphi 0, %s34
      %s54 = sphi 0, %s54
      %s56 = sphi 0, %s54
      %s57 = sphi 0, %s56
      %s71 = sphi 0, %s57
      %s75 = sphi 0, %s75
      %s77 = sphi 0, %s75
      %s78 = sphi 0, %s77
      %s92 = sphi 0, %s78
      %s98 = sphi 0, %s100
      %s101 = sphi 0, %s98
      %s102 = sphi 0, %s101
      %s118 = sphi 0, %s102
      %s124 = sphi 0, %s126
      %s127 = sphi 0, %s124
      %s128 = sphi 0, %s127
      %s144 = sphi 0, %s128
    $region4: #{tpu_custom_call.1} parent=1 // loop_header_branch
      %23 = sbr.rel (%p21) target = $region8
    $region5: #{tpu_custom_call.1} parent=1 // loop_body
      %s25 = ssub.s32 %s20, 1
      %s26 = ssub.s32 %s20, 2
      %s27 = sadd.s32 %s20, 1
      %s28 = ssub.s32 %s20, %s27
      %p29 = scmp.eq.s32.totalorder %s28, 0
      %s31 = sadd.s32 %s30, 1
      %s32 = scalar_select %p29, %s30, %s31
      %p35 = pneg %p29
      %p36 = scmp.eq.s32.totalorder %s20, 1
      %p37 = por %p35, %p36
      %p38 = scmp.ne.s32.totalorder %s30, %s33
      %p39 = scmp.eq.s32.totalorder %s20, 0
      %p40 = por %p38, %p39
      %p41 = scmp.ne.s32.totalorder %s30, %s33
      %p42 = scmp.eq.s32.totalorder %s25, 1
      %p43 = por %p41, %p42
      %p44 = scmp.ne.s32.totalorder %s33, %s34
      %p45 = scmp.eq.s32.totalorder %s25, 0
      %p46 = por %p44, %p45
      %p47 = scmp.ne.s32.totalorder %s33, %s34
      %p48 = scmp.eq.s32.totalorder %s26, 1
      %p49 = por %p47, %p48
      %p51 = scmp.ne.s32.totalorder %s34, %s50
      %p52 = scmp.eq.s32.totalorder %s26, 0
      %p53 = por %p51, %p52
      %s55 = sadd.s32 %s54, 1
      %p58 = scmp.eq.s32.totalorder %s20, 1
      %p59 = scmp.ne.s32.totalorder %s54, %s56
      %p60 = scmp.eq.s32.totalorder %s20, 0
      %p61 = por %p59, %p60
      %p62 = scmp.ne.s32.totalorder %s54, %s56
      %p63 = scmp.eq.s32.totalorder %s25, 1
      %p64 = por %p62, %p63
      %p65 = scmp.ne.s32.totalorder %s56, %s57
      %p66 = scmp.eq.s32.totalorder %s25, 0
      %p67 = por %p65, %p66
      %p68 = scmp.ne.s32.totalorder %s56, %s57
      %p69 = scmp.eq.s32.totalorder %s26, 1
      %p70 = por %p68, %p69
      %p72 = scmp.ne.s32.totalorder %s57, %s71
      %p73 = scmp.eq.s32.totalorder %s26, 0
      %p74 = por %p72, %p73
      %s76 = sadd.s32 %s75, 1
      %p79 = scmp.eq.s32.totalorder %s20, 1
      %p80 = scmp.ne.s32.totalorder %s75, %s77
      %p81 = scmp.eq.s32.totalorder %s20, 0
      %p82 = por %p80, %p81
      %p83 = scmp.ne.s32.totalorder %s75, %s77
      %p84 = scmp.eq.s32.totalorder %s25, 1
      %p85 = por %p83, %p84
      %p86 = scmp.ne.s32.totalorder %s77, %s78
      %p87 = scmp.eq.s32.totalorder %s25, 0
      %p88 = por %p86, %p87
      %p89 = scmp.ne.s32.totalorder %s77, %s78
      %p90 = scmp.eq.s32.totalorder %s26, 1
      %p91 = por %p89, %p90
      %p93 = scmp.ne.s32.totalorder %s78, %s92
      %p94 = scmp.eq.s32.totalorder %s26, 0
      %p95 = por %p93, %p94
      %s96 = ssub.s32 %s20, %s27
      %p97 = scmp.eq.s32.totalorder %s96, 0
      %s99 = sadd.s32 %s98, 1
      %s100 = scalar_select %p97, %s98, %s99
      %p103 = pneg %p97
      %p104 = scmp.eq.s32.totalorder %s20, 1
      %p105 = por %p103, %p104
      %p106 = scmp.ne.s32.totalorder %s98, %s101
      %p107 = scmp.eq.s32.totalorder %s20, 0
      %p108 = por %p106, %p107
      %p109 = scmp.ne.s32.totalorder %s98, %s101
      %p110 = scmp.eq.s32.totalorder %s25, 1
      %p111 = por %p109, %p110
      %p112 = scmp.ne.s32.totalorder %s101, %s102
      %p113 = scmp.eq.s32.totalorder %s25, 0
      %p114 = por %p112, %p113
      %p115 = scmp.ne.s32.totalorder %s101, %s102
      %p116 = scmp.eq.s32.totalorder %s26, 1
      %p117 = por %p115, %p116
      %p119 = scmp.ne.s32.totalorder %s102, %s118
      %p120 = scmp.eq.s32.totalorder %s26, 0
      %p121 = por %p119, %p120
      %s122 = ssub.s32 %s20, %s27
      %p123 = scmp.eq.s32.totalorder %s122, 0
      %s125 = sadd.s32 %s124, 1
      %s126 = scalar_select %p123, %s124, %s125
      %p129 = pneg %p123
      %p130 = scmp.eq.s32.totalorder %s20, 1
      %p131 = por %p129, %p130
      %p132 = scmp.ne.s32.totalorder %s124, %s127
      %p133 = scmp.eq.s32.totalorder %s20, 0
      %p134 = por %p132, %p133
      %p135 = scmp.ne.s32.totalorder %s124, %s127
      %p136 = scmp.eq.s32.totalorder %s25, 1
      %p137 = por %p135, %p136
      %p138 = scmp.ne.s32.totalorder %s127, %s128
      %p139 = scmp.eq.s32.totalorder %s25, 0
      %p140 = por %p138, %p139
      %p141 = scmp.ne.s32.totalorder %s127, %s128
      %p142 = scmp.eq.s32.totalorder %s26, 1
      %p143 = por %p141, %p142
      %p145 = scmp.ne.s32.totalorder %s128, %s144
      %p146 = scmp.eq.s32.totalorder %s26, 0
      %p147 = por %p145, %p146
      %p148 = scmp.le.s32.totalorder 1, %s20
      %p149 = scmp.lt.s32.totalorder %s20, 3
      %p150 = pnand %p148, %p149
      %p151 = pneg %p150
      // Predicated region
      $region9: #{tpu_custom_call.1} parent=5 // pred_check
        _
      $region10: #{tpu_custom_call.1} parent=5 // pred_check_branch
        %153 = sbr.rel (%p150) target = $region12
      $region11: #{tpu_custom_call.1} parent=5 // pred_region
        %s154 = ssub.s32 %s20, 1
        // Predicated region
        $region13: #{tpu_custom_call.1} parent=11 // pred_check
          %p155 = pneg %p67
        $region14: #{tpu_custom_call.1} parent=11 // pred_check_branch
          %157 = sbr.rel (%p155) target = $region16
        $region15: #{tpu_custom_call.1} parent=11 // pred_region
          _
        $region16: #{tpu_custom_call.1} parent=11 // pred_fallthru
          _
        // Predicated region
        $region17: #{tpu_custom_call.1} parent=11 // pred_check
          %p158 = pneg %p88
        $region18: #{tpu_custom_call.1} parent=11 // pred_check_branch
          %160 = sbr.rel (%p158) target = $region20
        $region19: #{tpu_custom_call.1} parent=11 // pred_region
          _
        $region20: #{tpu_custom_call.1} parent=11 // pred_fallthru
          _
      $region12: #{tpu_custom_call.1} parent=5 // pred_fallthru
        _
      %p161 = scmp.lt.s32.totalorder %s20, 2
      // Predicated region
      $region21: #{tpu_custom_call.1} parent=5 // pred_check
        %p162 = pneg %p161
      $region22: #{tpu_custom_call.1} parent=5 // pred_check_branch
        %164 = sbr.rel (%p162) target = $region24
      $region23: #{tpu_custom_call.1} parent=5 // pred_region
        // Predicated region
        $region25: #{tpu_custom_call.1} parent=23 // pred_check
          %p165 = pneg %p40
        $region26: #{tpu_custom_call.1} parent=23 // pred_check_branch
          %167 = sbr.rel (%p165) target = $region28
        $region27: #{tpu_custom_call.1} parent=23 // pred_region
          %s168 = sand.u32 %s30, 1
          %s169 = scalar_lea.sflag [#allocation3], %s168
          %s170 = sand.u32 %s30, 1
          %s171 = smul.addr %s170, 48
          %s172 = scalar_lea.vmem [#allocation2], %s171
          %s173 = smul.u32 2, %s20
          %s175 = ssub.s32 768, 768
          %176 = vsyncadd %s169, %s175
          %s177 = smul.addr %s173, 64
          %s178 = scalar_lea.hbm %s0, %s177
          %s179 = sshll.u32 %s172, 4
          %s180 = int_to_ptr.vmem [resolvable:$true] %s179
          %185 = dma.hbm_to_vmem [thread:$0]  %s178, 768, %s180, %s169, 256, 128, 8
        $region28: #{tpu_custom_call.1} parent=23 // pred_fallthru
          _
      $region24: #{tpu_custom_call.1} parent=5 // pred_fallthru
        _
      %p186 = scmp.le.s32.totalorder 1, %s20
      %p187 = scmp.lt.s32.totalorder %s20, 3
      %p188 = pnand %p186, %p187
      %p189 = pneg %p188
      // Predicated region
      $region29: #{tpu_custom_call.1} parent=5 // pred_check
        _
      $region30: #{tpu_custom_call.1} parent=5 // pred_check_branch
        %191 = sbr.rel (%p188) target = $region32
      $region31: #{tpu_custom_call.1} parent=5 // pred_region
        %s192 = ssub.s32 %s20, 1
        %s193 = sand.u32 %s33, 1
        %s194 = scalar_lea.sflag [#allocation3], %s193
        %s195 = sand.u32 %s33, 1
        %s196 = smul.addr %s195, 48
        %s197 = scalar_lea.vmem [#allocation2], %s196
        // Predicated region
        $region33: #{tpu_custom_call.1} parent=31 // pred_check
          %p198 = pneg %p46
        $region34: #{tpu_custom_call.1} parent=31 // pred_check_branch
          %200 = sbr.rel (%p198) target = $region36
        $region35: #{tpu_custom_call.1} parent=31 // pred_region
          %201 = dma.done %s194, 768
        $region36: #{tpu_custom_call.1} parent=31 // pred_fallthru
          _
        %s202 = sand.u32 %s33, 1
        %s203 = scalar_lea.sflag [#allocation3], %s202
        %s204 = sand.u32 %s33, 1
        %s205 = smul.addr %s204, 48
        %s206 = scalar_lea.vmem [#allocation2], %s205
        %p207 = pneg %p46
        %p208 = pneg %p43
        %p209 = pneg %p67
        %p210 = pneg %p64
        %p211 = pneg %p88
        %p212 = pneg %p85
        %p213 = pneg %p114
        %p214 = pneg %p111
        %s215 = sand.u32 %s101, 1
        %s216 = scalar_lea.sflag [#allocation4], %s215
        %s217 = sand.u32 %s101, 1
        %s218 = smul.addr %s217, 32
        %s219 = scalar_lea.vmem [#allocation5], %s218
        %p220 = pneg %p140
        %p221 = pneg %p137
        %s222 = sand.u32 %s127, 1
        %s223 = scalar_lea.sflag [#allocation7], %s222
        %s224 = sand.u32 %s127, 1
        %s225 = smul.addr %s224, 32
        %s226 = scalar_lea.vmem [#allocation6], %s225
        %s227 = smul.u32 2, %s25
        %s228 = smul.u32 2, %s25
        %v230 = vld [vmem:[%s1] sm:$0xf]
        %v231 = vld [vmem:[%s1 + $0x4] sm:$0xf]
        %v232 = vld [vmem:[%s197] sm:$0xff]
        %v233 = vld [vmem:[%s197 + $0x8] sm:$0xff]
        %v234 = vld [vmem:[%s197 + $0x10] sm:$0xff]
        %v235 = vld [vmem:[%s197 + $0x18] sm:$0xff]
        %v236 = vld [vmem:[%s197 + $0x20] sm:$0xff]
        %v237 = vld [vmem:[%s197 + $0x28] sm:$0xff]
        %v238 = vld [vmem:[%s2] sm:$0xff]
        %v239 = vld [vmem:[%s2 + $0x8] sm:$0xff]
        %241 = vset.pattern.permute.xlu0 0
        %242 = vperm.xlu0 %241, %v238
        %v243 = vpop.permute.xlu0 %242
        %246 = vset.pattern.permute.xlu0 0
        %247 = vperm.xlu0 %246, %v239
        %v248 = vpop.permute.xlu0 %247
        %v252 = vunpack.c.l.b16 %v230
        %v253 = vunpack.c.l.b16 %v231
        %v254 = vpack.c.b16 %v253, %v252
        %v261 = vunpack.c.l.b16 %v232
        %v262 = vunpack.c.h.b16 %v232
        %v263 = vunpack.c.l.b16 %v233
        %v264 = vunpack.c.h.b16 %v233
        %v265 = vunpack.c.l.b16 %v234
        %v266 = vunpack.c.h.b16 %v234
        %v267 = vunpack.c.l.b16 %v235
        %v268 = vunpack.c.h.b16 %v235
        %v269 = vunpack.c.l.b16 %v236
        %v270 = vunpack.c.h.b16 %v236
        %v271 = vunpack.c.l.b16 %v237
        %v272 = vunpack.c.h.b16 %v237
        %v273 = vpack.c.b16 %v263, %v261
        %v274 = vpack.c.b16 %v264, %v262
        %v275 = vpack.c.b16 %v267, %v265
        %v276 = vpack.c.b16 %v268, %v266
        %v277 = vpack.c.b16 %v271, %v269
        %v278 = vpack.c.b16 %v272, %v270
        %vm285 = vcmask 392192
        %v287 = vsel %vm285, %v254, 0
        %289 = vmatprep.subr.bf16.mxu0 %v274
        %290 = vmatpush1.bf16.msra.mxu0 %v273
        %291 = vmatprep.subr.bf16.mxu0 %v276
        %292 = vmatpush1.bf16.msra.mxu0 %v275
        %293 = vmatprep.subr.bf16.mxu0 %v278
        %294 = vmatpush1.bf16.msra.mxu0 %v277
        %295 = vmatprep.subr.bf16.mxu0 0
        %296 = vmatpush1.bf16.msra.mxu0 0
        %297 = vmatprep.subr.bf16.mxu0 0
        %298 = vmatpush1.bf16.msra.mxu0 0
        %299 = vmatprep.subr.bf16.mxu0 0
        %300 = vmatpush1.bf16.msra.mxu0 0
        %301 = vmatprep.subr.bf16.mxu0 0
        %302 = vmatpush1.bf16.msra.mxu0 0
        %303 = vmatprep.subr.bf16.mxu0 0
        %304 = vmatpush1.bf16.msra.mxu0 0
        %305 = vmatprep.subr.bf16.mxu0 0
        %306 = vmatpush1.bf16.msra.mxu0 0
        %307 = vmatprep.subr.bf16.mxu0 0
        %308 = vmatpush1.bf16.msra.mxu0 0
        %309 = vmatprep.subr.bf16.mxu0 0
        %310 = vmatpush1.bf16.msra.mxu0 0
        %311 = vmatprep.subr.bf16.mxu0 0
        %312 = vmatpush1.bf16.msra.mxu0 0
        %313 = vmatprep.subr.bf16.mxu0 0
        %314 = vmatpush1.bf16.msra.mxu0 0
        %315 = vmatprep.subr.bf16.mxu0 0
        %316 = vmatpush1.bf16.msra.mxu0 0
        %317 = vmatprep.subr.bf16.mxu0 0
        %318 = vmatpush1.bf16.msra.mxu0 0
        %319 = vmatprep.subr.bf16.mxu0 0
        %320 = vmatpush1.bf16.msra.mxu0 0
        %321 = vmatprep.mubr.bf16.mxu0 0
        %322 = vmatmul.mubr.bf16.gmra.mrb[0].mxu0 %v287
        %v323 = vpop.f32.mrb[0].mxu0
        %v324 = vadd.f32 %v243, %v323
        %v325 = vpop.f32.mrb[0].mxu0
        %v326 = vadd.f32 %v243, %v325
        %v327 = vpop.f32.mrb[0].mxu0
        %v328 = vadd.f32 %v248, %v327
        %v329 = vpop.f32.mrb[0].mxu0
        %v330 = vadd.f32 %v248, %v329
        %331 = vdwg.mxu0
        %v332 = vmax.f32 %v324, 0.0
        %v333 = vmax.f32 %v326, 0.0
        %v334 = vmax.f32 %v328, 0.0
        %v335 = vmax.f32 %v330, 0.0
        %336 = vst [vmem:[%s219] sm:$0xff] %v332
        %337 = vst [vmem:[%s219 + $0x8] sm:$0xff] %v333
        %338 = vst [vmem:[%s219 + $0x10] sm:$0xff] %v334
        %339 = vst [vmem:[%s219 + $0x18] sm:$0xff] %v335
        %p340 = scmp.ne.s32.totalorder %s25, 1
        // Predicated region
        $region37: #{tpu_custom_call.1} parent=31 // pred_check
          %p341 = pneg %p340
        $region38: #{tpu_custom_call.1} parent=31 // pred_check_branch
          %343 = sbr.rel (%p341) target = $region40
        $region39: #{tpu_custom_call.1} parent=31 // pred_region
          %v344 = vadd.f32 %v332, %v333
          %345 = vadd.xlane.f32.xlu0 %v344
          %v346 = vpop.xlane.xlu0 %345
          %v347 = vadd.f32 %v334, %v335
          %348 = vadd.xlane.f32.xlu0 %v347
          %v349 = vpop.xlane.xlu0 %348
          %v350 = vmul.f32 %v332, %v332
          %v351 = vmul.f32 %v333, %v333
          %v352 = vmul.f32 %v334, %v334
          %v353 = vmul.f32 %v335, %v335
          %v354 = vadd.f32 %v350, %v351
          %355 = vadd.xlane.f32.xlu0 %v354
          %v356 = vpop.xlane.xlu0 %355
          %v357 = vadd.f32 %v352, %v353
          %358 = vadd.xlane.f32.xlu0 %v357
          %v359 = vpop.xlane.xlu0 %358
          %361 = vset.pattern.permute.xlu0 0
          %362 = vperm.xlu0 %361, %v346
          %v363 = vpop.permute.xlu0 %362
          %366 = vset.pattern.permute.xlu0 0
          %367 = vperm.xlu0 %366, %v349
          %v368 = vpop.permute.xlu0 %367
          %371 = vset.pattern.permute.xlu0 0
          %372 = vperm.xlu0 %371, %v356
          %v373 = vpop.permute.xlu0 %372
          %376 = vset.pattern.permute.xlu0 0
          %377 = vperm.xlu0 %376, %v359
          %v378 = vpop.permute.xlu0 %377
          %380 = vst [vmem:[%s226] sm:$0xff] %v363
          %381 = vst [vmem:[%s226 + $0x8] sm:$0xff] %v368
          %382 = vst [vmem:[%s226 + $0x10] sm:$0xff] %v373
          %383 = vst [vmem:[%s226 + $0x18] sm:$0xff] %v378
        $region40: #{tpu_custom_call.1} parent=31 // pred_fallthru
          _
        %p384 = scmp.eq.s32.totalorder %s25, 1
        // Predicated region
        $region41: #{tpu_custom_call.1} parent=31 // pred_check
          %p385 = pneg %p384
        $region42: #{tpu_custom_call.1} parent=31 // pred_check_branch
          %387 = sbr.rel (%p385) target = $region44
        $region43: #{tpu_custom_call.1} parent=31 // pred_region
          %v388 = vlaneseq
          %v389 = vand.u32 %v388, 127
          %v390 = vadd.s32 %v389, 128
          %s391 = smul.u32 %s25, 256
          %v392 = vstv %s391
          %v393 = vadd.s32 %v389, %v392
          %v394 = vadd.s32 %v390, %v392
          %vm395 = vcmp.lt.s32.totalorder %v393, 512
          %vm396 = vcmp.lt.s32.totalorder %v394, 512
          %v397 = vsel %vm395, 1, 0
          %v398 = vsel %vm396, 1, 0
          %vm399 = vcmp.eq.s32.totalorder %v397, 1
          %vm400 = vcmp.eq.s32.totalorder %v398, 1
          %v401 = vsel %vm399, %v332, 0.0
          %v402 = vsel %vm400, %v333, 0.0
          %v403 = vsel %vm399, %v334, 0.0
          %v404 = vsel %vm400, %v335, 0.0
          %v405 = vadd.f32 %v401, %v402
          %406 = vadd.xlane.f32.xlu0 %v405
          %v407 = vpop.xlane.xlu0 %406
          %v408 = vadd.f32 %v403, %v404
          %409 = vadd.xlane.f32.xlu0 %v408
          %v410 = vpop.xlane.xlu0 %409
          %v411 = vmul.f32 %v401, %v401
          %v412 = vmul.f32 %v402, %v402
          %v413 = vmul.f32 %v403, %v403
          %v414 = vmul.f32 %v404, %v404
          %v415 = vadd.f32 %v411, %v412
          %416 = vadd.xlane.f32.xlu0 %v415
          %v417 = vpop.xlane.xlu0 %416
          %v418 = vadd.f32 %v413, %v414
          %419 = vadd.xlane.f32.xlu0 %v418
          %v420 = vpop.xlane.xlu0 %419
          %422 = vset.pattern.permute.xlu0 0
          %423 = vperm.xlu0 %422, %v407
          %v424 = vpop.permute.xlu0 %423
          %427 = vset.pattern.permute.xlu0 0
          %428 = vperm.xlu0 %427, %v410
          %v429 = vpop.permute.xlu0 %428
          %432 = vset.pattern.permute.xlu0 0
          %433 = vperm.xlu0 %432, %v417
          %v434 = vpop.permute.xlu0 %433
          %437 = vset.pattern.permute.xlu0 0
          %438 = vperm.xlu0 %437, %v420
          %v439 = vpop.permute.xlu0 %438
          %441 = vst [vmem:[%s226] sm:$0xff] %v424
          %442 = vst [vmem:[%s226 + $0x8] sm:$0xff] %v429
          %443 = vst [vmem:[%s226 + $0x10] sm:$0xff] %v434
          %444 = vst [vmem:[%s226 + $0x18] sm:$0xff] %v439
        $region44: #{tpu_custom_call.1} parent=31 // pred_fallthru
          _
        %s445 = sand.u32 %s101, 1
        %s446 = scalar_lea.sflag [#allocation4], %s445
        %s447 = sand.u32 %s101, 1
        %s448 = smul.addr %s447, 32
        %s449 = scalar_lea.vmem [#allocation5], %s448
        %s450 = sand.u32 %s127, 1
        %s451 = scalar_lea.sflag [#allocation7], %s450
        %s452 = sand.u32 %s127, 1
        %s453 = smul.addr %s452, 32
        %s454 = scalar_lea.vmem [#allocation6], %s453
        // Predicated region
        $region45: #{tpu_custom_call.1} parent=31 // pred_check
          %p455 = pneg %p111
        $region46: #{tpu_custom_call.1} parent=31 // pred_check_branch
          %457 = sbr.rel (%p455) target = $region48
        $region47: #{tpu_custom_call.1} parent=31 // pred_region
          %s458 = smul.u32 2, %s25
          %s460 = ssub.s32 512, 512
          %461 = vsyncadd %s446, %s460
          %s462 = smul.addr %s458, 128
          %s463 = scalar_lea.hbm %s3, %s462
          %s464 = sshll.u32 %s449, 4
          %s465 = int_to_ptr.vmem [resolvable:$true] %s464
          %470 = dma.vmem_to_hbm [thread:$0]  %s465, 512, %s463, %s446, 256, 512, 16
        $region48: #{tpu_custom_call.1} parent=31 // pred_fallthru
          _
        // Predicated region
        $region49: #{tpu_custom_call.1} parent=31 // pred_check
          %p471 = pneg %p137
        $region50: #{tpu_custom_call.1} parent=31 // pred_check_branch
          %473 = sbr.rel (%p471) target = $region52
        $region51: #{tpu_custom_call.1} parent=31 // pred_region
          %s475 = ssub.s32 512, 512
          %476 = vsyncadd %s451, %s475
          %s477 = smul.addr %s25, 4
          %s478 = smul.addr %s477, 128
          %s479 = scalar_lea.hbm %s4, %s478
          %s480 = sshll.u32 %s454, 4
          %s481 = int_to_ptr.vmem [resolvable:$true] %s480
          %486 = dma.vmem_to_hbm [thread:$0]  %s481, 512, %s479, %s451, 128, 128, 8
        $region52: #{tpu_custom_call.1} parent=31 // pred_fallthru
          _
      $region32: #{tpu_custom_call.1} parent=5 // pred_fallthru
        _
      %p487 = scmp.le.s32.totalorder 2, %s20
      // Predicated region
      $region53: #{tpu_custom_call.1} parent=5 // pred_check
        %p488 = pneg %p487
      $region54: #{tpu_custom_call.1} parent=5 // pred_check_branch
        %490 = sbr.rel (%p488) target = $region56
      $region55: #{tpu_custom_call.1} parent=5 // pred_region
        %s491 = ssub.s32 %s20, 2
        // Predicated region
        $region57: #{tpu_custom_call.1} parent=55 // pred_check
          %p492 = pneg %p117
        $region58: #{tpu_custom_call.1} parent=55 // pred_check_branch
          %494 = sbr.rel (%p492) target = $region60
        $region59: #{tpu_custom_call.1} parent=55 // pred_region
          %s495 = sand.u32 %s102, 1
          %s496 = scalar_lea.sflag [#allocation4], %s495
          %s497 = sand.u32 %s102, 1
          %s498 = smul.addr %s497, 32
          %s499 = scalar_lea.vmem [#allocation5], %s498
          %500 = dma.done %s496, 512
        $region60: #{tpu_custom_call.1} parent=55 // pred_fallthru
          _
        // Predicated region
        $region61: #{tpu_custom_call.1} parent=55 // pred_check
          %p501 = pneg %p143
        $region62: #{tpu_custom_call.1} parent=55 // pred_check_branch
          %503 = sbr.rel (%p501) target = $region64
        $region63: #{tpu_custom_call.1} parent=55 // pred_region
          %s504 = sand.u32 %s128, 1
          %s505 = scalar_lea.sflag [#allocation7], %s504
          %s506 = sand.u32 %s128, 1
          %s507 = smul.addr %s506, 32
          %s508 = scalar_lea.vmem [#allocation6], %s507
          %509 = dma.done %s505, 512
        $region64: #{tpu_custom_call.1} parent=55 // pred_fallthru
          _
      $region56: #{tpu_custom_call.1} parent=5 // pred_fallthru
        _
    $region6: #{tpu_custom_call.1} parent=1 // loop_footer
      %s24 = sadd.s32 1, %s20
    $region7: #{tpu_custom_call.1} parent=1 // loop_footer_branch
      %19 = sbr.rel target = $region3
    $region8: #{tpu_custom_call.1} parent=1 // loop_exit
      _
    %510 = vsyncpa [#allocation3], 1
    %s511 = scalar_lea.sflag [#allocation3], 1
    %512 = vsyncpa %s511, 1
    %513 = vsyncpa [#allocation4], 1
    %s514 = scalar_lea.sflag [#allocation4], 1
    %515 = vsyncpa %s514, 1
    %516 = vsyncpa [#allocation7], 1
    %s517 = scalar_lea.sflag [#allocation7], 1
    %518 = vsyncpa %s517, 1

</llo_original>
